<compile_context>
chip_gen: v7x
topology: tpu7x:2x2x1
jax: 0.10.0
libtpu: 0.0.40
codegen_flags: <defaults>
</compile_context>

<pallas_src>
import jax
import jax.numpy as jnp
from jax import lax
from jax.experimental import pallas as pl
from jax.experimental.pallas import tpu as pltpu


def _token_mixer_kernel(x_ref, p2_ref, wc_ref, bc_ref, wm_ref, bm_ref, o_ref):
    """Single grid step over the whole (tiny) problem.

    x_ref  : (M, D)    M = B*N_v rows, D = p*p*dim_c lanes (patch-major tokens)
    p2_ref : (2D, 2D)  blockdiag(P, P); P = per-token channel-averaging matrix
    wc_ref : (D, V)    conv weight flattened (ph, pw, cc)->dim_v, LN gamma folded
    bc_ref : (1, V)    conv bias with LN beta folded in
    wm_ref : (Nv, Nv)  token-mixer weight
    bm_ref : (Nv, 1)   token-mixer bias
    o_ref  : (B, Nv, V)
    """
    x = x_ref[...]                                   # (M, D) f32
    d = x.shape[1]

    # --- LayerNorm stats: ONE lane-concat MXU launch gives E[x] and E[x^2]
    #     per token, already broadcast over each token's dim_c lanes by P.
    #     precision=HIGHEST on this dot only: E[x^2]-mu^2 cancels badly at
    #     bf16 when |mean| >> std, and this dot is tiny anyway. ---
    stats = jnp.dot(jnp.concatenate([x, x * x], axis=1), p2_ref[...],
                    precision=lax.Precision.HIGHEST,
                    preferred_element_type=jnp.float32)          # (M, 2D)
    mu = stats[:, :d]
    var = jnp.maximum(stats[:, d:] - mu * mu, 0.0)   # guard vs. rounding
    xn = (x - mu) * lax.rsqrt(var + 1e-6)            # gamma/beta folded into wc/bc

    # --- Conv2d(k=p, stride=p) == patch matmul (all batches at once) ---
    z = jnp.dot(xn, wc_ref[...],
                preferred_element_type=jnp.float32) + bc_ref[...]   # (M, V)

    # --- per-batch token mixer + final transpose: y[b] = mix_w @ z[b] + mix_b.
    #     Statically unrolled over the small batch; weight/FLOPs linear in B.
    #     TODO(synk): for large B move the batch onto a grid axis instead of
    #     unrolling (keeps live ranges bounded). ---
    nb, nv = o_ref.shape[0], o_ref.shape[1]
    wm = wm_ref[...]
    bm = bm_ref[...]
    for b in range(nb):
        zb = z[b * nv:(b + 1) * nv, :]                               # (Nv, V)
        yb = jnp.dot(wm, zb, preferred_element_type=jnp.float32) + bm
        o_ref[b] = yb.astype(o_ref.dtype)


def make_token_mixer_fblock_c2v(params, patches_shape, token_pool_size):
    """Bind params ONCE (all weight prep happens here, not per call) and return
    a jitted apply(x: (B, N, dim_c)) -> (B, N_v, dim_v)."""
    H, W = patches_shape
    p = token_pool_size
    Hp, Wp = H // p, W // p
    Nv = Hp * Wp
    dim_v, dim_c = params["conv_w"].shape[0], params["conv_w"].shape[1]
    D = p * p * dim_c
    f32 = jnp.float32

    # conv weight (dim_v, dim_c, p, p) -> (ph, pw, cc, dim_v) -> (D, dim_v)
    wc0 = jnp.transpose(params["conv_w"].astype(f32), (2, 3, 1, 0)).reshape(D, dim_v)
    gamma_t = jnp.tile(params["ln_w"].astype(f32), p * p)            # (D,)
    beta_t = jnp.tile(params["ln_b"].astype(f32), p * p)             # (D,)
    # fold the LayerNorm affine into the conv weight/bias:
    #   (xhat*g + b) @ wc0 + cb == xhat @ (g[:,None]*wc0) + (b @ wc0 + cb)
    wc = gamma_t[:, None] * wc0                                      # (D, dim_v)
    bc = (jnp.dot(beta_t, wc0, precision=lax.Precision.HIGHEST)
          + params["conv_b"].astype(f32)).reshape(1, dim_v)

    # per-token channel-averaging matrix and its lane-concat block diagonal
    P = jnp.kron(jnp.eye(p * p, dtype=f32),
                 jnp.full((dim_c, dim_c), 1.0 / dim_c, dtype=f32))   # (D, D)
    P2 = jnp.kron(jnp.eye(2, dtype=f32), P)                          # (2D, 2D)

    wm = params["mix_w"].astype(f32)                                 # (Nv, Nv)
    bm = params["mix_b"].astype(f32).reshape(Nv, 1)                  # (Nv, 1)

    def apply(x):
        B, N, C = x.shape
        assert N == H * W and C == dim_c
        M = B * Nv

        # token n -> spatial (n // W, n % W); regroup into non-overlapping pxp
        # patches, within-patch order (ph, pw, channel), batch stacked on rows.
        xr = (x.reshape(B, Hp, p, Wp, p, C)
                .transpose(0, 1, 3, 2, 4, 5)
                .reshape(M, D))                                      # (M, D)

        return pl.pallas_call(
            _token_mixer_kernel,
            out_shape=jax.ShapeDtypeStruct((B, Nv, dim_v), x.dtype),
            grid=(1,),
            in_specs=[
                pl.BlockSpec((M, D), lambda i: (0, 0)),
                pl.BlockSpec((2 * D, 2 * D), lambda i: (0, 0)),
                pl.BlockSpec((D, dim_v), lambda i: (0, 0)),
                pl.BlockSpec((1, dim_v), lambda i: (0, 0)),
                pl.BlockSpec((Nv, Nv), lambda i: (0, 0)),
                pl.BlockSpec((Nv, 1), lambda i: (0, 0)),
            ],
            out_specs=pl.BlockSpec((B, Nv, dim_v), lambda i: (0, 0, 0)),
            compiler_params=pltpu.CompilerParams(
                dimension_semantics=("arbitrary",)),
        )(xr, P2, wc, bc, wm, bm)

    return jax.jit(apply)


def reference(x, params, patches_shape, token_pool_size):
    """Pure-JAX f32 reference mirroring the PyTorch forward exactly."""
    B, N, C = x.shape
    H, W = patches_shape
    p = token_pool_size
    dim_v = params["conv_w"].shape[0]
    Nv = (H // p) * (W // p)

    mu = x.mean(-1, keepdims=True)
    var = ((x - mu) ** 2).mean(-1, keepdims=True)
    xn = (x - mu) / jnp.sqrt(var + 1e-6) * params["ln_w"] + params["ln_b"]

    xi = xn.transpose(0, 2, 1).reshape(B, C, H, W)                   # NCHW
    conv = lax.conv_general_dilated(
        xi, params["conv_w"], window_strides=(p, p), padding="VALID",
        dimension_numbers=("NCHW", "OIHW", "NCHW"),
        precision=lax.Precision.HIGHEST)
    conv = conv + params["conv_b"].reshape(1, dim_v, 1, 1)
    z = conv.reshape(B, dim_v, Nv)

    y = jnp.einsum("bvn,mn->bvm", z, params["mix_w"],
                   precision=lax.Precision.HIGHEST) + params["mix_b"]
    return y.transpose(0, 2, 1)                                      # (B, N_v, dim_v)


if __name__ == "__main__":
    # module hyperparameters (small, consistent with the module definition)
    dim_c, dim_v = 4, 8
    patches_shape = (16, 16)
    token_pool_size = 4
    B = 2
    N = patches_shape[0] * patches_shape[1]                          # 256
    Nv = N // token_pool_size ** 2                                   # 16

    key = jax.random.PRNGKey(0)
    k = jax.random.split(key, 7)
    params = {
        "ln_w":   1.0 + 0.1 * jax.random.normal(k[0], (dim_c,), jnp.float32),
        "ln_b":   0.1 * jax.random.normal(k[1], (dim_c,), jnp.float32),
        "conv_w": 0.1 * jax.random.normal(
            k[2], (dim_v, dim_c, token_pool_size, token_pool_size), jnp.float32),
        "conv_b": 0.1 * jax.random.normal(k[3], (dim_v,), jnp.float32),
        "mix_w":  0.1 * jax.random.normal(k[4], (Nv, Nv), jnp.float32),
        "mix_b":  0.1 * jax.random.normal(k[5], (Nv,), jnp.float32),
    }
    x = jax.random.normal(k[6], (B, N, dim_c), jnp.float32)

    # conv/mixer dots use single-pass bf16 MXU passes (f32 accumulate); compare
    # against the f32-HIGHEST reference with a bf16-appropriate tolerance.
    TOL = dict(rtol=2e-2, atol=2e-2)

    # params bound once here; per-call path is patch-regroup + one pallas_call.
    apply_fn = make_token_mixer_fblock_c2v(params, patches_shape, token_pool_size)

    ref = jax.block_until_ready(reference(x, params, patches_shape, token_pool_size))
    out = jax.block_until_ready(apply_fn(x))
    assert out.shape == ref.shape == (B, Nv, dim_v)
    if not jnp.allclose(out, ref, **TOL):
        raise AssertionError("Pallas kernel does not match reference")

    # shifted-mean input (|mean| >> std): exercises the HIGHEST-precision
    # LayerNorm-stats path (no catastrophic cancellation in var).
    x_shift = x + 10.0
    ref_s = jax.block_until_ready(
        reference(x_shift, params, patches_shape, token_pool_size))
    out_s = jax.block_until_ready(apply_fn(x_shift))
    if not jnp.allclose(out_s, ref_s, **TOL):
        raise AssertionError("Pallas kernel does not match reference (shifted mean)")

    print("KERNEL_OK")
</pallas_src>

<mosaic_0001>
module attributes {stable_mosaic.version = 11 : i64} {
  func.func @_token_mixer_kernel(%arg0: i32, %arg1: memref<32x64xf32, #tpu.memory_space<vmem>>, %arg2: memref<128x128xf32, #tpu.memory_space<vmem>>, %arg3: memref<64x8xf32, #tpu.memory_space<vmem>>, %arg4: memref<1x8xf32, #tpu.memory_space<vmem>>, %arg5: memref<16x16xf32, #tpu.memory_space<vmem>>, %arg6: memref<16x1xf32, #tpu.memory_space<vmem>>, %arg7: memref<2x16x8xf32, #tpu.memory_space<vmem>>) attributes {dimension_semantics = [#tpu.dimension_semantics<arbitrary>], iteration_bounds = array<i64: 1>, scalar_prefetch = 0 : i64, scratch_operands = 0 : i64, tpu.core_type = #tpu.core_type<tc>, window_params = [{pipeline_mode = #tpu.pipeline_mode<synchronous>, transform_indices = @transform_0, window_bounds = array<i64: 32, 64>}, {pipeline_mode = #tpu.pipeline_mode<synchronous>, transform_indices = @transform_1, window_bounds = array<i64: 128, 128>}, {pipeline_mode = #tpu.pipeline_mode<synchronous>, transform_indices = @transform_2, window_bounds = array<i64: 64, 8>}, {pipeline_mode = #tpu.pipeline_mode<synchronous>, transform_indices = @transform_3, window_bounds = array<i64: 1, 8>}, {pipeline_mode = #tpu.pipeline_mode<synchronous>, transform_indices = @transform_4, window_bounds = array<i64: 16, 16>}, {pipeline_mode = #tpu.pipeline_mode<synchronous>, transform_indices = @transform_5, window_bounds = array<i64: 16, 1>}, {pipeline_mode = #tpu.pipeline_mode<synchronous>, transform_indices = @transform_6, window_bounds = array<i64: 2, 16, 8>}]} {
    %c0 = arith.constant 0 : index
    %c0_0 = arith.constant 0 : index
    %0 = vector.load %arg1[%c0, %c0_0] : memref<32x64xf32, #tpu.memory_space<vmem>>, vector<32x64xf32>
    %1 = arith.mulf %0, %0 : vector<32x64xf32>
    %2 = tpu.concatenate %0, %1 in 1 : vector<32x64xf32>, vector<32x64xf32> -> vector<32x128xf32>
    %c0_1 = arith.constant 0 : index
    %c0_2 = arith.constant 0 : index
    %3 = vector.load %arg2[%c0_1, %c0_2] : memref<128x128xf32, #tpu.memory_space<vmem>>, vector<128x128xf32>
    %cst = arith.constant dense<0.000000e+00> : vector<32x128xf32>
    %4 = tpu.matmul %2, %3, %cst {dimension_numbers = #tpu.dot_dimension_numbers<[1], [0], [0], [1], [0, 0, 1, 1], [], []>, precision = #tpu.contract_precision<fp32>} : vector<32x128xf32>, vector<128x128xf32>, vector<32x128xf32> -> vector<32x128xf32>
    %5 = vector.extract_strided_slice %4 {offsets = [0, 0], sizes = [32, 64], strides = [1, 1]} : vector<32x128xf32> to vector<32x64xf32>
    %6 = vector.extract_strided_slice %4 {offsets = [0, 64], sizes = [32, 64], strides = [1, 1]} : vector<32x128xf32> to vector<32x64xf32>
    %7 = arith.mulf %5, %5 : vector<32x64xf32>
    %8 = arith.subf %6, %7 : vector<32x64xf32>
    %cst_3 = arith.constant 0.000000e+00 : f32
    %9 = vector.broadcast %cst_3 : f32 to vector<32x64xf32>
    %10 = arith.maximumf %8, %9 : vector<32x64xf32>
    %11 = arith.subf %0, %5 : vector<32x64xf32>
    %cst_4 = arith.constant 9.99999997E-7 : f32
    %12 = vector.broadcast %cst_4 : f32 to vector<32x64xf32>
    %13 = arith.addf %10, %12 : vector<32x64xf32>
    %14 = math.rsqrt %13 : vector<32x64xf32>
    %15 = arith.mulf %11, %14 : vector<32x64xf32>
    %c0_5 = arith.constant 0 : index
    %c0_6 = arith.constant 0 : index
    %16 = vector.load %arg3[%c0_5, %c0_6] : memref<64x8xf32, #tpu.memory_space<vmem>>, vector<64x8xf32>
    %cst_7 = arith.constant dense<0.000000e+00> : vector<32x8xf32>
    %17 = tpu.matmul %15, %16, %cst_7 {dimension_numbers = #tpu.dot_dimension_numbers<[1], [0], [0], [1], [0, 0, 1, 1], [], []>} : vector<32x64xf32>, vector<64x8xf32>, vector<32x8xf32> -> vector<32x8xf32>
    %c0_8 = arith.constant 0 : index
    %c0_9 = arith.constant 0 : index
    %18 = vector.load %arg4[%c0_8, %c0_9] : memref<1x8xf32, #tpu.memory_space<vmem>>, vector<1x8xf32>
    %19 = vector.broadcast %18 : vector<1x8xf32> to vector<32x8xf32>
    %20 = arith.addf %17, %19 : vector<32x8xf32>
    %c0_10 = arith.constant 0 : index
    %c0_11 = arith.constant 0 : index
    %21 = vector.load %arg5[%c0_10, %c0_11] : memref<16x16xf32, #tpu.memory_space<vmem>>, vector<16x16xf32>
    %c0_12 = arith.constant 0 : index
    %c0_13 = arith.constant 0 : index
    %22 = vector.load %arg6[%c0_12, %c0_13] : memref<16x1xf32, #tpu.memory_space<vmem>>, vector<16x1xf32>
    %23 = vector.extract_strided_slice %20 {offsets = [0, 0], sizes = [16, 8], strides = [1, 1]} : vector<32x8xf32> to vector<16x8xf32>
    %cst_14 = arith.constant dense<0.000000e+00> : vector<16x8xf32>
    %24 = tpu.matmul %21, %23, %cst_14 {dimension_numbers = #tpu.dot_dimension_numbers<[1], [0], [0], [1], [0, 0, 1, 1], [], []>} : vector<16x16xf32>, vector<16x8xf32>, vector<16x8xf32> -> vector<16x8xf32>
    %25 = vector.broadcast %22 : vector<16x1xf32> to vector<16x8xf32>
    %26 = arith.addf %24, %25 : vector<16x8xf32>
    %c0_15 = arith.constant 0 : index
    %c0_16 = arith.constant 0 : index
    %c0_17 = arith.constant 0 : index
    %27 = vector.load %arg7[%c0_15, %c0_16, %c0_17] : memref<2x16x8xf32, #tpu.memory_space<vmem>>, vector<1x16x8xf32>
    %28 = vector.shape_cast %27 : vector<1x16x8xf32> to vector<16x8xf32>
    %29 = vector.shape_cast %26 : vector<16x8xf32> to vector<1x16x8xf32>
    tpu.vector_store %arg7[%c0_15, %c0_16, %c0_17], %29 {strides = array<i32>} : memref<2x16x8xf32, #tpu.memory_space<vmem>>, vector<1x16x8xf32>,
    %30 = vector.extract_strided_slice %20 {offsets = [16, 0], sizes = [16, 8], strides = [1, 1]} : vector<32x8xf32> to vector<16x8xf32>
    %cst_18 = arith.constant dense<0.000000e+00> : vector<16x8xf32>
    %31 = tpu.matmul %21, %30, %cst_18 {dimension_numbers = #tpu.dot_dimension_numbers<[1], [0], [0], [1], [0, 0, 1, 1], [], []>} : vector<16x16xf32>, vector<16x8xf32>, vector<16x8xf32> -> vector<16x8xf32>
    %32 = vector.broadcast %22 : vector<16x1xf32> to vector<16x8xf32>
    %33 = arith.addf %31, %32 : vector<16x8xf32>
    %c1 = arith.constant 1 : index
    %c0_19 = arith.constant 0 : index
    %c0_20 = arith.constant 0 : index
    %34 = vector.load %arg7[%c1, %c0_19, %c0_20] : memref<2x16x8xf32, #tpu.memory_space<vmem>>, vector<1x16x8xf32>
    %35 = vector.shape_cast %34 : vector<1x16x8xf32> to vector<16x8xf32>
    %36 = vector.shape_cast %33 : vector<16x8xf32> to vector<1x16x8xf32>
    tpu.vector_store %arg7[%c1, %c0_19, %c0_20], %36 {strides = array<i32>} : memref<2x16x8xf32, #tpu.memory_space<vmem>>, vector<1x16x8xf32>,
    return
  }
  func.func @transform_0(%arg0: i32) -> (i32, i32) {
    %c0_i32 = arith.constant 0 : i32
    %c0_i32_0 = arith.constant 0 : i32
    %c0_i32_1 = arith.constant 0 : i32
    return %c0_i32, %c0_i32_0 : i32, i32
  }
  func.func @transform_1(%arg0: i32) -> (i32, i32) {
    %c0_i32 = arith.constant 0 : i32
    %c0_i32_0 = arith.constant 0 : i32
    %c0_i32_1 = arith.constant 0 : i32
    return %c0_i32, %c0_i32_0 : i32, i32
  }
  func.func @transform_2(%arg0: i32) -> (i32, i32) {
    %c0_i32 = arith.constant 0 : i32
    %c0_i32_0 = arith.constant 0 : i32
    %c0_i32_1 = arith.constant 0 : i32
    return %c0_i32, %c0_i32_0 : i32, i32
  }
  func.func @transform_3(%arg0: i32) -> (i32, i32) {
    %c0_i32 = arith.constant 0 : i32
    %c0_i32_0 = arith.constant 0 : i32
    %c0_i32_1 = arith.constant 0 : i32
    return %c0_i32, %c0_i32_0 : i32, i32
  }
  func.func @transform_4(%arg0: i32) -> (i32, i32) {
    %c0_i32 = arith.constant 0 : i32
    %c0_i32_0 = arith.constant 0 : i32
    %c0_i32_1 = arith.constant 0 : i32
    return %c0_i32, %c0_i32_0 : i32, i32
  }
  func.func @transform_5(%arg0: i32) -> (i32, i32) {
    %c0_i32 = arith.constant 0 : i32
    %c0_i32_0 = arith.constant 0 : i32
    %c0_i32_1 = arith.constant 0 : i32
    return %c0_i32, %c0_i32_0 : i32, i32
  }
  func.func @transform_6(%arg0: i32) -> (i32, i32, i32) {
    %c0_i32 = arith.constant 0 : i32
    %c0_i32_0 = arith.constant 0 : i32
    %c0_i32_1 = arith.constant 0 : i32
    %c0_i32_2 = arith.constant 0 : i32
    return %c0_i32, %c0_i32_0, %c0_i32_1 : i32, i32, i32
  }
}

</mosaic_0001>

<llo_original>
// kernel: apply.1
$region0: #{apply.1}
  #allocation0 [shape = 'u32[]', space=smem, size = 0x4, offset = 0x4, fixed_abs, tag = 'smem constant byte address 0x4 - core index']
  #allocation1 [shape = 'u32[144,128]{1,0:T(1,128)}', space=vmem, size = 0x12000, scoped, tag = 'internal scratch']
  %s0 = inlined_call_operand.vmem [shape: f32[32,64], index: 0, kind: input, shape index: {}]
  %s1 = inlined_call_operand.vmem [shape: f32[128,128], index: 1, kind: input, shape index: {}]
  %s2 = inlined_call_operand.vmem [shape: f32[64,8], index: 2, kind: input, shape index: {}]
  %s3 = inlined_call_operand.vmem [shape: f32[1,8], index: 3, kind: input, shape index: {}]
  %s4 = inlined_call_operand.vmem [shape: f32[16,16], index: 4, kind: input, shape index: {}]
  %s5 = inlined_call_operand.vmem [shape: f32[16,1], index: 5, kind: input, shape index: {}]
  %s6 = inlined_call_operand.vmem [shape: f32[2,16,8], index: 6, kind: output, shape index: {}]
  %s7 = sld [smem:[#allocation0]]
  $region34: #{apply.1} parent=0
    _
  %s9 = ssub.s32 1, %s7
  %s10 = scalar_select 0, %s9, %s7
  // Predicated region
  $region2: #{apply.1} parent=0 // pred_check
    _
  $region3: #{apply.1} parent=0 // pred_check_branch
    %12 = sbr.rel (0) target = $region5
  $region4: #{apply.1} parent=0 // pred_region
    _
  $region5: #{apply.1} parent=0 // pred_fallthru
    _
  // Predicated region
  $region6: #{apply.1} parent=0 // pred_check
    _
  $region7: #{apply.1} parent=0 // pred_check_branch
    %14 = sbr.rel (0) target = $region9
  $region8: #{apply.1} parent=0 // pred_region
    _
  $region9: #{apply.1} parent=0 // pred_fallthru
    _
  // Predicated region
  $region10: #{apply.1} parent=0 // pred_check
    _
  $region11: #{apply.1} parent=0 // pred_check_branch
    %16 = sbr.rel (0) target = $region13
  $region12: #{apply.1} parent=0 // pred_region
    _
  $region13: #{apply.1} parent=0 // pred_fallthru
    _
  // Predicated region
  $region14: #{apply.1} parent=0 // pred_check
    _
  $region15: #{apply.1} parent=0 // pred_check_branch
    %18 = sbr.rel (0) target = $region17
  $region16: #{apply.1} parent=0 // pred_region
    _
  $region17: #{apply.1} parent=0 // pred_fallthru
    _
  // Predicated region
  $region18: #{apply.1} parent=0 // pred_check
    _
  $region19: #{apply.1} parent=0 // pred_check_branch
    %20 = sbr.rel (0) target = $region21
  $region20: #{apply.1} parent=0 // pred_region
    _
  $region21: #{apply.1} parent=0 // pred_fallthru
    _
  // Predicated region
  $region22: #{apply.1} parent=0 // pred_check
    _
  $region23: #{apply.1} parent=0 // pred_check_branch
    %22 = sbr.rel (0) target = $region25
  $region24: #{apply.1} parent=0 // pred_region
    _
  $region25: #{apply.1} parent=0 // pred_fallthru
    _
  %v23 = vld [vmem:[%s0] sm:$0xff]
  %v24 = vld [vmem:[%s0 + $0x8] sm:$0xff]
  %v25 = vld [vmem:[%s0 + $0x10] sm:$0xff]
  %v26 = vld [vmem:[%s0 + $0x18] sm:$0xff]
  %v27 = vmul.f32 %v23, %v23
  %v28 = vmul.f32 %v24, %v24
  %v29 = vmul.f32 %v25, %v25
  %v30 = vmul.f32 %v26, %v26
  %35 = vrot.lane.b32.xlu0 %v27, 64
  %v36 = vpop.permute.xlu0 %35
  %37 = vrot.lane.b32.xlu0 %v28, 64
  %v38 = vpop.permute.xlu0 %37
  %39 = vrot.lane.b32.xlu0 %v29, 64
  %v40 = vpop.permute.xlu0 %39
  %41 = vrot.lane.b32.xlu0 %v30, 64
  %v42 = vpop.permute.xlu0 %41
  %vm47 = vcmask 523264
  %v48 = vsel %vm47, %v23, %v36
  %v49 = vsel %vm47, %v24, %v38
  %v50 = vsel %vm47, %v25, %v40
  %v51 = vsel %vm47, %v26, %v42
  %v52 = vld [vmem:[%s1] sm:$0xff]
  %v53 = vld [vmem:[%s1 + $0x8] sm:$0xff]
  %v54 = vld [vmem:[%s1 + $0x10] sm:$0xff]
  %v55 = vld [vmem:[%s1 + $0x18] sm:$0xff]
  %v56 = vld [vmem:[%s1 + $0x20] sm:$0xff]
  %v57 = vld [vmem:[%s1 + $0x28] sm:$0xff]
  %v58 = vld [vmem:[%s1 + $0x30] sm:$0xff]
  %v59 = vld [vmem:[%s1 + $0x38] sm:$0xff]
  %v60 = vld [vmem:[%s1 + $0x40] sm:$0xff]
  %v61 = vld [vmem:[%s1 + $0x48] sm:$0xff]
  %v62 = vld [vmem:[%s1 + $0x50] sm:$0xff]
  %v63 = vld [vmem:[%s1 + $0x58] sm:$0xff]
  %v64 = vld [vmem:[%s1 + $0x60] sm:$0xff]
  %v65 = vld [vmem:[%s1 + $0x68] sm:$0xff]
  %v66 = vld [vmem:[%s1 + $0x70] sm:$0xff]
  %v67 = vld [vmem:[%s1 + $0x78] sm:$0xff]
  %68 = vmatprep.subr.mxu0 0.0
  %v69 = vand.u32 %v52, 4294901760
  %70 = vmatpush1.msra.mxu0 %v69
  %71 = vmatprep.subr.mxu0 0.0
  %v72 = vand.u32 %v53, 4294901760
  %73 = vmatpush1.msra.mxu0 %v72
  %74 = vmatprep.subr.mxu0 0.0
  %v75 = vand.u32 %v54, 4294901760
  %76 = vmatpush1.msra.mxu0 %v75
  %77 = vmatprep.subr.mxu0 0.0
  %v78 = vand.u32 %v55, 4294901760
  %79 = vmatpush1.msra.mxu0 %v78
  %80 = vmatprep.subr.mxu0 0.0
  %v81 = vand.u32 %v56, 4294901760
  %82 = vmatpush1.msra.mxu0 %v81
  %83 = vmatprep.subr.mxu0 0.0
  %v84 = vand.u32 %v57, 4294901760
  %85 = vmatpush1.msra.mxu0 %v84
  %86 = vmatprep.subr.mxu0 0.0
  %v87 = vand.u32 %v58, 4294901760
  %88 = vmatpush1.msra.mxu0 %v87
  %89 = vmatprep.subr.mxu0 0.0
  %v90 = vand.u32 %v59, 4294901760
  %91 = vmatpush1.msra.mxu0 %v90
  %92 = vmatprep.subr.mxu0 0.0
  %v93 = vand.u32 %v60, 4294901760
  %94 = vmatpush1.msra.mxu0 %v93
  %95 = vmatprep.subr.mxu0 0.0
  %v96 = vand.u32 %v61, 4294901760
  %97 = vmatpush1.msra.mxu0 %v96
  %98 = vmatprep.subr.mxu0 0.0
  %v99 = vand.u32 %v62, 4294901760
  %100 = vmatpush1.msra.mxu0 %v99
  %101 = vmatprep.subr.mxu0 0.0
  %v102 = vand.u32 %v63, 4294901760
  %103 = vmatpush1.msra.mxu0 %v102
  %104 = vmatprep.subr.mxu0 0.0
  %v105 = vand.u32 %v64, 4294901760
  %106 = vmatpush1.msra.mxu0 %v105
  %107 = vmatprep.subr.mxu0 0.0
  %v108 = vand.u32 %v65, 4294901760
  %109 = vmatpush1.msra.mxu0 %v108
  %110 = vmatprep.subr.mxu0 0.0
  %v111 = vand.u32 %v66, 4294901760
  %112 = vmatpush1.msra.mxu0 %v111
  %113 = vmatprep.subr.mxu0 0.0
  %v114 = vand.u32 %v67, 4294901760
  %115 = vmatpush1.msra.mxu0 %v114
  %116 = vmatprep.subr.mxu0 0.0
  %117 = vmatpush1.msra.mxu0 0.0
  %118 = vmatprep.subr.mxu0 0.0
  %119 = vmatpush1.msra.mxu0 0.0
  %120 = vmatprep.subr.mxu0 0.0
  %121 = vmatpush1.msra.mxu0 0.0
  %122 = vmatprep.subr.mxu0 0.0
  %123 = vmatpush1.msra.mxu0 0.0
  %124 = vmatprep.subr.mxu0 0.0
  %125 = vmatpush1.msra.mxu0 0.0
  %126 = vmatprep.subr.mxu0 0.0
  %127 = vmatpush1.msra.mxu0 0.0
  %128 = vmatprep.subr.mxu0 0.0
  %129 = vmatpush1.msra.mxu0 0.0
  %130 = vmatprep.subr.mxu0 0.0
  %131 = vmatpush1.msra.mxu0 0.0
  %132 = vmatprep.subr.mxu0 0.0
  %133 = vmatpush1.msra.mxu0 0.0
  %134 = vmatprep.subr.mxu0 0.0
  %135 = vmatpush1.msra.mxu0 0.0
  %136 = vmatprep.subr.mxu0 0.0
  %137 = vmatpush1.msra.mxu0 0.0
  %138 = vmatprep.subr.mxu0 0.0
  %139 = vmatpush1.msra.mxu0 0.0
  %140 = vmatprep.subr.mxu0 0.0
  %141 = vmatpush1.msra.mxu0 0.0
  %142 = vmatprep.subr.mxu0 0.0
  %143 = vmatpush1.msra.mxu0 0.0
  %144 = vmatprep.subr.mxu0 0.0
  %145 = vmatpush1.msra.mxu0 0.0
  %146 = vmatprep.subr.mxu0 0.0
  %147 = vmatpush1.msra.mxu0 0.0
  %148 = vmatprep.mubr.f32.mxu0 0.0
  %v149 = vand.u32 %v48, 4294901760
  %v150 = vsub.f32 %v48, %v149
  %v151 = vand.u32 %v150, 4294901760
  %v152 = vsub.f32 %v150, %v151
  %v153 = vand.u32 %v152, 4294901760
  %154 = vmatmul.mubr.f32.gmra.mrb[0].mxu0 %v153
  %v155 = vpop.f32.mrb[0].mxu0
  %v156 = vadd.f32 0.0, %v155
  %v157 = vpop.f32.mrb[0].mxu0
  %158 = vmatprep.mubr.f32.mxu0 0.0
  %v159 = vand.u32 %v49, 4294901760
  %v160 = vsub.f32 %v49, %v159
  %v161 = vand.u32 %v160, 4294901760
  %v162 = vsub.f32 %v160, %v161
  %v163 = vand.u32 %v162, 4294901760
  %164 = vmatmul.mubr.f32.gmra.mrb[0].mxu0 %v163
  %v165 = vpop.f32.mrb[0].mxu0
  %v166 = vadd.f32 0.0, %v165
  %v167 = vpop.f32.mrb[0].mxu0
  %168 = vmatprep.mubr.f32.mxu0 0.0
  %v169 = vand.u32 %v50, 4294901760
  %v170 = vsub.f32 %v50, %v169
  %v171 = vand.u32 %v170, 4294901760
  %v172 = vsub.f32 %v170, %v171
  %v173 = vand.u32 %v172, 4294901760
  %174 = vmatmul.mubr.f32.gmra.mrb[0].mxu0 %v173
  %v175 = vpop.f32.mrb[0].mxu0
  %v176 = vadd.f32 0.0, %v175
  %v177 = vpop.f32.mrb[0].mxu0
  %178 = vmatprep.mubr.f32.mxu0 0.0
  %v179 = vand.u32 %v51, 4294901760
  %v180 = vsub.f32 %v51, %v179
  %v181 = vand.u32 %v180, 4294901760
  %v182 = vsub.f32 %v180, %v181
  %v183 = vand.u32 %v182, 4294901760
  %184 = vmatmul.mubr.f32.gmra.mrb[0].mxu0 %v183
  %v185 = vpop.f32.mrb[0].mxu0
  %v186 = vadd.f32 0.0, %v185
  %v187 = vpop.f32.mrb[0].mxu0
  %188 = vdwg.mxu0
  %189 = vmatprep.subr.mxu0 0.0
  %v190 = vand.u32 %v52, 4294901760
  %v191 = vsub.f32 %v52, %v190
  %v192 = vand.u32 %v191, 4294901760
  %v193 = vsub.f32 %v191, %v192
  %v194 = vand.u32 %v193, 4294901760
  %195 = vmatpush1.msra.mxu0 %v194
  %196 = vmatprep.subr.mxu0 0.0
  %v197 = vand.u32 %v53, 4294901760
  %v198 = vsub.f32 %v53, %v197
  %v199 = vand.u32 %v198, 4294901760
  %v200 = vsub.f32 %v198, %v199
  %v201 = vand.u32 %v200, 4294901760
  %202 = vmatpush1.msra.mxu0 %v201
  %203 = vmatprep.subr.mxu0 0.0
  %v204 = vand.u32 %v54, 4294901760
  %v205 = vsub.f32 %v54, %v204
  %v206 = vand.u32 %v205, 4294901760
  %v207 = vsub.f32 %v205, %v206
  %v208 = vand.u32 %v207, 4294901760
  %209 = vmatpush1.msra.mxu0 %v208
  %210 = vmatprep.subr.mxu0 0.0
  %v211 = vand.u32 %v55, 4294901760
  %v212 = vsub.f32 %v55, %v211
  %v213 = vand.u32 %v212, 4294901760
  %v214 = vsub.f32 %v212, %v213
  %v215 = vand.u32 %v214, 4294901760
  %216 = vmatpush1.msra.mxu0 %v215
  %217 = vmatprep.subr.mxu0 0.0
  %v218 = vand.u32 %v56, 4294901760
  %v219 = vsub.f32 %v56, %v218
  %v220 = vand.u32 %v219, 4294901760
  %v221 = vsub.f32 %v219, %v220
  %v222 = vand.u32 %v221, 4294901760
  %223 = vmatpush1.msra.mxu0 %v222
  %224 = vmatprep.subr.mxu0 0.0
  %v225 = vand.u32 %v57, 4294901760
  %v226 = vsub.f32 %v57, %v225
  %v227 = vand.u32 %v226, 4294901760
  %v228 = vsub.f32 %v226, %v227
  %v229 = vand.u32 %v228, 4294901760
  %230 = vmatpush1.msra.mxu0 %v229
  %231 = vmatprep.subr.mxu0 0.0
  %v232 = vand.u32 %v58, 4294901760
  %v233 = vsub.f32 %v58, %v232
  %v234 = vand.u32 %v233, 4294901760
  %v235 = vsub.f32 %v233, %v234
  %v236 = vand.u32 %v235, 4294901760
  %237 = vmatpush1.msra.mxu0 %v236
  %238 = vmatprep.subr.mxu0 0.0
  %v239 = vand.u32 %v59, 4294901760
  %v240 = vsub.f32 %v59, %v239
  %v241 = vand.u32 %v240, 4294901760
  %v242 = vsub.f32 %v240, %v241
  %v243 = vand.u32 %v242, 4294901760
  %244 = vmatpush1.msra.mxu0 %v243
  %245 = vmatprep.subr.mxu0 0.0
  %v246 = vand.u32 %v60, 4294901760
  %v247 = vsub.f32 %v60, %v246
  %v248 = vand.u32 %v247, 4294901760
  %v249 = vsub.f32 %v247, %v248
  %v250 = vand.u32 %v249, 4294901760
  %251 = vmatpush1.msra.mxu0 %v250
  %252 = vmatprep.subr.mxu0 0.0
  %v253 = vand.u32 %v61, 4294901760
  %v254 = vsub.f32 %v61, %v253
  %v255 = vand.u32 %v254, 4294901760
  %v256 = vsub.f32 %v254, %v255
  %v257 = vand.u32 %v256, 4294901760
  %258 = vmatpush1.msra.mxu0 %v257
  %259 = vmatprep.subr.mxu0 0.0
  %v260 = vand.u32 %v62, 4294901760
  %v261 = vsub.f32 %v62, %v260
  %v262 = vand.u32 %v261, 4294901760
  %v263 = vsub.f32 %v261, %v262
  %v264 = vand.u32 %v263, 4294901760
  %265 = vmatpush1.msra.mxu0 %v264
  %266 = vmatprep.subr.mxu0 0.0
  %v267 = vand.u32 %v63, 4294901760
  %v268 = vsub.f32 %v63, %v267
  %v269 = vand.u32 %v268, 4294901760
  %v270 = vsub.f32 %v268, %v269
  %v271 = vand.u32 %v270, 4294901760
  %272 = vmatpush1.msra.mxu0 %v271
  %273 = vmatprep.subr.mxu0 0.0
  %v274 = vand.u32 %v64, 4294901760
  %v275 = vsub.f32 %v64, %v274
  %v276 = vand.u32 %v275, 4294901760
  %v277 = vsub.f32 %v275, %v276
  %v278 = vand.u32 %v277, 4294901760
  %279 = vmatpush1.msra.mxu0 %v278
  %280 = vmatprep.subr.mxu0 0.0
  %v281 = vand.u32 %v65, 4294901760
  %v282 = vsub.f32 %v65, %v281
  %v283 = vand.u32 %v282, 4294901760
  %v284 = vsub.f32 %v282, %v283
  %v285 = vand.u32 %v284, 4294901760
  %286 = vmatpush1.msra.mxu0 %v285
  %287 = vmatprep.subr.mxu0 0.0
  %v288 = vand.u32 %v66, 4294901760
  %v289 = vsub.f32 %v66, %v288
  %v290 = vand.u32 %v289, 4294901760
  %v291 = vsub.f32 %v289, %v290
  %v292 = vand.u32 %v291, 4294901760
  %293 = vmatpush1.msra.mxu0 %v292
  %294 = vmatprep.subr.mxu0 0.0
  %v295 = vand.u32 %v67, 4294901760
  %v296 = vsub.f32 %v67, %v295
  %v297 = vand.u32 %v296, 4294901760
  %v298 = vsub.f32 %v296, %v297
  %v299 = vand.u32 %v298, 4294901760
  %300 = vmatpush1.msra.mxu0 %v299
  %301 = vmatprep.subr.mxu0 0.0
  %302 = vmatpush1.msra.mxu0 0.0
  %303 = vmatprep.subr.mxu0 0.0
  %304 = vmatpush1.msra.mxu0 0.0
  %305 = vmatprep.subr.mxu0 0.0
  %306 = vmatpush1.msra.mxu0 0.0
  %307 = vmatprep.subr.mxu0 0.0
  %308 = vmatpush1.msra.mxu0 0.0
  %309 = vmatprep.subr.mxu0 0.0
  %310 = vmatpush1.msra.mxu0 0.0
  %311 = vmatprep.subr.mxu0 0.0
  %312 = vmatpush1.msra.mxu0 0.0
  %313 = vmatprep.subr.mxu0 0.0
  %314 = vmatpush1.msra.mxu0 0.0
  %315 = vmatprep.subr.mxu0 0.0
  %316 = vmatpush1.msra.mxu0 0.0
  %317 = vmatprep.subr.mxu0 0.0
  %318 = vmatpush1.msra.mxu0 0.0
  %319 = vmatprep.subr.mxu0 0.0
  %320 = vmatpush1.msra.mxu0 0.0
  %321 = vmatprep.subr.mxu0 0.0
  %322 = vmatpush1.msra.mxu0 0.0
  %323 = vmatprep.subr.mxu0 0.0
  %324 = vmatpush1.msra.mxu0 0.0
  %325 = vmatprep.subr.mxu0 0.0
  %326 = vmatpush1.msra.mxu0 0.0
  %327 = vmatprep.subr.mxu0 0.0
  %328 = vmatpush1.msra.mxu0 0.0
  %329 = vmatprep.subr.mxu0 0.0
  %330 = vmatpush1.msra.mxu0 0.0
  %331 = vmatprep.subr.mxu0 0.0
  %332 = vmatpush1.msra.mxu0 0.0
  %333 = vmatprep.mubr.f32.mxu0 0.0
  %v334 = vand.u32 %v48, 4294901760
  %335 = vmatmul.mubr.f32.gmra.mrb[0].mxu0 %v334
  %v336 = vpop.f32.mrb[0].mxu0
  %v337 = vadd.f32 %v156, %v336
  %v338 = vpop.f32.mrb[0].mxu0
  %339 = vmatprep.mubr.f32.mxu0 0.0
  %v340 = vand.u32 %v49, 4294901760
  %341 = vmatmul.mubr.f32.gmra.mrb[0].mxu0 %v340
  %v342 = vpop.f32.mrb[0].mxu0
  %v343 = vadd.f32 %v166, %v342
  %v344 = vpop.f32.mrb[0].mxu0
  %345 = vmatprep.mubr.f32.mxu0 0.0
  %v346 = vand.u32 %v50, 4294901760
  %347 = vmatmul.mubr.f32.gmra.mrb[0].mxu0 %v346
  %v348 = vpop.f32.mrb[0].mxu0
  %v349 = vadd.f32 %v176, %v348
  %v350 = vpop.f32.mrb[0].mxu0
  %351 = vmatprep.mubr.f32.mxu0 0.0
  %v352 = vand.u32 %v51, 4294901760
  %353 = vmatmul.mubr.f32.gmra.mrb[0].mxu0 %v352
  %v354 = vpop.f32.mrb[0].mxu0
  %v355 = vadd.f32 %v186, %v354
  %v356 = vpop.f32.mrb[0].mxu0
  %357 = vdwg.mxu0
  %358 = vmatprep.subr.mxu0 0.0
  %v359 = vand.u32 %v52, 4294901760
  %v360 = vsub.f32 %v52, %v359
  %361 = vmatpush1.msra.mxu0 %v360
  %362 = vmatprep.subr.mxu0 0.0
  %v363 = vand.u32 %v53, 4294901760
  %v364 = vsub.f32 %v53, %v363
  %365 = vmatpush1.msra.mxu0 %v364
  %366 = vmatprep.subr.mxu0 0.0
  %v367 = vand.u32 %v54, 4294901760
  %v368 = vsub.f32 %v54, %v367
  %369 = vmatpush1.msra.mxu0 %v368
  %370 = vmatprep.subr.mxu0 0.0
  %v371 = vand.u32 %v55, 4294901760
  %v372 = vsub.f32 %v55, %v371
  %373 = vmatpush1.msra.mxu0 %v372
  %374 = vmatprep.subr.mxu0 0.0
  %v375 = vand.u32 %v56, 4294901760
  %v376 = vsub.f32 %v56, %v375
  %377 = vmatpush1.msra.mxu0 %v376
  %378 = vmatprep.subr.mxu0 0.0
  %v379 = vand.u32 %v57, 4294901760
  %v380 = vsub.f32 %v57, %v379
  %381 = vmatpush1.msra.mxu0 %v380
  %382 = vmatprep.subr.mxu0 0.0
  %v383 = vand.u32 %v58, 4294901760
  %v384 = vsub.f32 %v58, %v383
  %385 = vmatpush1.msra.mxu0 %v384
  %386 = vmatprep.subr.mxu0 0.0
  %v387 = vand.u32 %v59, 4294901760
  %v388 = vsub.f32 %v59, %v387
  %389 = vmatpush1.msra.mxu0 %v388
  %390 = vmatprep.subr.mxu0 0.0
  %v391 = vand.u32 %v60, 4294901760
  %v392 = vsub.f32 %v60, %v391
  %393 = vmatpush1.msra.mxu0 %v392
  %394 = vmatprep.subr.mxu0 0.0
  %v395 = vand.u32 %v61, 4294901760
  %v396 = vsub.f32 %v61, %v395
  %397 = vmatpush1.msra.mxu0 %v396
  %398 = vmatprep.subr.mxu0 0.0
  %v399 = vand.u32 %v62, 4294901760
  %v400 = vsub.f32 %v62, %v399
  %401 = vmatpush1.msra.mxu0 %v400
  %402 = vmatprep.subr.mxu0 0.0
  %v403 = vand.u32 %v63, 4294901760
  %v404 = vsub.f32 %v63, %v403
  %405 = vmatpush1.msra.mxu0 %v404
  %406 = vmatprep.subr.mxu0 0.0
  %v407 = vand.u32 %v64, 4294901760
  %v408 = vsub.f32 %v64, %v407
  %409 = vmatpush1.msra.mxu0 %v408
  %410 = vmatprep.subr.mxu0 0.0
  %v411 = vand.u32 %v65, 4294901760
  %v412 = vsub.f32 %v65, %v411
  %413 = vmatpush1.msra.mxu0 %v412
  %414 = vmatprep.subr.mxu0 0.0
  %v415 = vand.u32 %v66, 4294901760
  %v416 = vsub.f32 %v66, %v415
  %417 = vmatpush1.msra.mxu0 %v416
  %418 = vmatprep.subr.mxu0 0.0
  %v419 = vand.u32 %v67, 4294901760
  %v420 = vsub.f32 %v67, %v419
  %421 = vmatpush1.msra.mxu0 %v420
  %422 = vmatprep.subr.mxu0 0.0
  %423 = vmatpush1.msra.mxu0 0.0
  %424 = vmatprep.subr.mxu0 0.0
  %425 = vmatpush1.msra.mxu0 0.0
  %426 = vmatprep.subr.mxu0 0.0
  %427 = vmatpush1.msra.mxu0 0.0
  %428 = vmatprep.subr.mxu0 0.0
  %429 = vmatpush1.msra.mxu0 0.0
  %430 = vmatprep.subr.mxu0 0.0
  %431 = vmatpush1.msra.mxu0 0.0
  %432 = vmatprep.subr.mxu0 0.0
  %433 = vmatpush1.msra.mxu0 0.0
  %434 = vmatprep.subr.mxu0 0.0
  %435 = vmatpush1.msra.mxu0 0.0
  %436 = vmatprep.subr.mxu0 0.0
  %437 = vmatpush1.msra.mxu0 0.0
  %438 = vmatprep.subr.mxu0 0.0
  %439 = vmatpush1.msra.mxu0 0.0
  %440 = vmatprep.subr.mxu0 0.0
  %441 = vmatpush1.msra.mxu0 0.0
  %442 = vmatprep.subr.mxu0 0.0
  %443 = vmatpush1.msra.mxu0 0.0
  %444 = vmatprep.subr.mxu0 0.0
  %445 = vmatpush1.msra.mxu0 0.0
  %446 = vmatprep.subr.mxu0 0.0
  %447 = vmatpush1.msra.mxu0 0.0
  %448 = vmatprep.subr.mxu0 0.0
  %449 = vmatpush1.msra.mxu0 0.0
  %450 = vmatprep.subr.mxu0 0.0
  %451 = vmatpush1.msra.mxu0 0.0
  %452 = vmatprep.subr.mxu0 0.0
  %453 = vmatpush1.msra.mxu0 0.0
  %454 = vmatprep.mubr.f32.mxu0 0.0
  %v455 = vand.u32 %v48, 4294901760
  %v456 = vsub.f32 %v48, %v455
  %457 = vmatmul.mubr.f32.gmra.mrb[0].mxu0 %v456
  %v458 = vpop.f32.mrb[0].mxu0
  %v459 = vadd.f32 %v337, %v458
  %v460 = vpop.f32.mrb[0].mxu0
  %461 = vmatprep.mubr.f32.mxu0 0.0
  %v462 = vand.u32 %v49, 4294901760
  %v463 = vsub.f32 %v49, %v462
  %464 = vmatmul.mubr.f32.gmra.mrb[0].mxu0 %v463
  %v465 = vpop.f32.mrb[0].mxu0
  %v466 = vadd.f32 %v343, %v465
  %v467 = vpop.f32.mrb[0].mxu0
  %468 = vmatprep.mubr.f32.mxu0 0.0
  %v469 = vand.u32 %v50, 4294901760
  %v470 = vsub.f32 %v50, %v469
  %471 = vmatmul.mubr.f32.gmra.mrb[0].mxu0 %v470
  %v472 = vpop.f32.mrb[0].mxu0
  %v473 = vadd.f32 %v349, %v472
  %v474 = vpop.f32.mrb[0].mxu0
  %475 = vmatprep.mubr.f32.mxu0 0.0
  %v476 = vand.u32 %v51, 4294901760
  %v477 = vsub.f32 %v51, %v476
  %478 = vmatmul.mubr.f32.gmra.mrb[0].mxu0 %v477
  %v479 = vpop.f32.mrb[0].mxu0
  %v480 = vadd.f32 %v355, %v479
  %v481 = vpop.f32.mrb[0].mxu0
  %482 = vdwg.mxu0
  %483 = vmatprep.subr.mxu0 0.0
  %v484 = vand.u32 %v52, 4294901760
  %485 = vmatpush1.msra.mxu0 %v484
  %486 = vmatprep.subr.mxu0 0.0
  %v487 = vand.u32 %v53, 4294901760
  %488 = vmatpush1.msra.mxu0 %v487
  %489 = vmatprep.subr.mxu0 0.0
  %v490 = vand.u32 %v54, 4294901760
  %491 = vmatpush1.msra.mxu0 %v490
  %492 = vmatprep.subr.mxu0 0.0
  %v493 = vand.u32 %v55, 4294901760
  %494 = vmatpush1.msra.mxu0 %v493
  %495 = vmatprep.subr.mxu0 0.0
  %v496 = vand.u32 %v56, 4294901760
  %497 = vmatpush1.msra.mxu0 %v496
  %498 = vmatprep.subr.mxu0 0.0
  %v499 = vand.u32 %v57, 4294901760
  %500 = vmatpush1.msra.mxu0 %v499
  %501 = vmatprep.subr.mxu0 0.0
  %v502 = vand.u32 %v58, 4294901760
  %503 = vmatpush1.msra.mxu0 %v502
  %504 = vmatprep.subr.mxu0 0.0
  %v505 = vand.u32 %v59, 4294901760
  %506 = vmatpush1.msra.mxu0 %v505
  %507 = vmatprep.subr.mxu0 0.0
  %v508 = vand.u32 %v60, 4294901760
  %509 = vmatpush1.msra.mxu0 %v508
  %510 = vmatprep.subr.mxu0 0.0
  %v511 = vand.u32 %v61, 4294901760
  %512 = vmatpush1.msra.mxu0 %v511
  %513 = vmatprep.subr.mxu0 0.0
  %v514 = vand.u32 %v62, 4294901760
  %515 = vmatpush1.msra.mxu0 %v514
  %516 = vmatprep.subr.mxu0 0.0
  %v517 = vand.u32 %v63, 4294901760
  %518 = vmatpush1.msra.mxu0 %v517
  %519 = vmatprep.subr.mxu0 0.0
  %v520 = vand.u32 %v64, 4294901760
  %521 = vmatpush1.msra.mxu0 %v520
  %522 = vmatprep.subr.mxu0 0.0
  %v523 = vand.u32 %v65, 4294901760
  %524 = vmatpush1.msra.mxu0 %v523
  %525 = vmatprep.subr.mxu0 0.0
  %v526 = vand.u32 %v66, 4294901760
  %527 = vmatpush1.msra.mxu0 %v526
  %528 = vmatprep.subr.mxu0 0.0
  %v529 = vand.u32 %v67, 4294901760
  %530 = vmatpush1.msra.mxu0 %v529
  %531 = vmatprep.subr.mxu0 0.0
  %532 = vmatpush1.msra.mxu0 0.0
  %533 = vmatprep.subr.mxu0 0.0
  %534 = vmatpush1.msra.mxu0 0.0
  %535 = vmatprep.subr.mxu0 0.0
  %536 = vmatpush1.msra.mxu0 0.0
  %537 = vmatprep.subr.mxu0 0.0
  %538 = vmatpush1.msra.mxu0 0.0
  %539 = vmatprep.subr.mxu0 0.0
  %540 = vmatpush1.msra.mxu0 0.0
  %541 = vmatprep.subr.mxu0 0.0
  %542 = vmatpush1.msra.mxu0 0.0
  %543 = vmatprep.subr.mxu0 0.0
  %544 = vmatpush1.msra.mxu0 0.0
  %545 = vmatprep.subr.mxu0 0.0
  %546 = vmatpush1.msra.mxu0 0.0
  %547 = vmatprep.subr.mxu0 0.0
  %548 = vmatpush1.msra.mxu0 0.0
  %549 = vmatprep.subr.mxu0 0.0
  %550 = vmatpush1.msra.mxu0 0.0
  %551 = vmatprep.subr.mxu0 0.0
  %552 = vmatpush1.msra.mxu0 0.0
  %553 = vmatprep.subr.mxu0 0.0
  %554 = vmatpush1.msra.mxu0 0.0
  %555 = vmatprep.subr.mxu0 0.0
  %556 = vmatpush1.msra.mxu0 0.0
  %557 = vmatprep.subr.mxu0 0.0
  %558 = vmatpush1.msra.mxu0 0.0
  %559 = vmatprep.subr.mxu0 0.0
  %560 = vmatpush1.msra.mxu0 0.0
  %561 = vmatprep.subr.mxu0 0.0
  %562 = vmatpush1.msra.mxu0 0.0
  %563 = vmatprep.mubr.f32.mxu0 0.0
  %v564 = vand.u32 %v48, 4294901760
  %v565 = vsub.f32 %v48, %v564
  %v566 = vand.u32 %v565, 4294901760
  %567 = vmatmul.mubr.f32.gmra.mrb[0].mxu0 %v566
  %v568 = vpop.f32.mrb[0].mxu0
  %v569 = vadd.f32 %v459, %v568
  %v570 = vpop.f32.mrb[0].mxu0
  %571 = vmatprep.mubr.f32.mxu0 0.0
  %v572 = vand.u32 %v49, 4294901760
  %v573 = vsub.f32 %v49, %v572
  %v574 = vand.u32 %v573, 4294901760
  %575 = vmatmul.mubr.f32.gmra.mrb[0].mxu0 %v574
  %v576 = vpop.f32.mrb[0].mxu0
  %v577 = vadd.f32 %v466, %v576
  %v578 = vpop.f32.mrb[0].mxu0
  %579 = vmatprep.mubr.f32.mxu0 0.0
  %v580 = vand.u32 %v50, 4294901760
  %v581 = vsub.f32 %v50, %v580
  %v582 = vand.u32 %v581, 4294901760
  %583 = vmatmul.mubr.f32.gmra.mrb[0].mxu0 %v582
  %v584 = vpop.f32.mrb[0].mxu0
  %v585 = vadd.f32 %v473, %v584
  %v586 = vpop.f32.mrb[0].mxu0
  %587 = vmatprep.mubr.f32.mxu0 0.0
  %v588 = vand.u32 %v51, 4294901760
  %v589 = vsub.f32 %v51, %v588
  %v590 = vand.u32 %v589, 4294901760
  %591 = vmatmul.mubr.f32.gmra.mrb[0].mxu0 %v590
  %v592 = vpop.f32.mrb[0].mxu0
  %v593 = vadd.f32 %v480, %v592
  %v594 = vpop.f32.mrb[0].mxu0
  %595 = vdwg.mxu0
  %596 = vmatprep.subr.mxu0 0.0
  %v597 = vand.u32 %v52, 4294901760
  %v598 = vsub.f32 %v52, %v597
  %v599 = vand.u32 %v598, 4294901760
  %600 = vmatpush1.msra.mxu0 %v599
  %601 = vmatprep.subr.mxu0 0.0
  %v602 = vand.u32 %v53, 4294901760
  %v603 = vsub.f32 %v53, %v602
  %v604 = vand.u32 %v603, 4294901760
  %605 = vmatpush1.msra.mxu0 %v604
  %606 = vmatprep.subr.mxu0 0.0
  %v607 = vand.u32 %v54, 4294901760
  %v608 = vsub.f32 %v54, %v607
  %v609 = vand.u32 %v608, 4294901760
  %610 = vmatpush1.msra.mxu0 %v609
  %611 = vmatprep.subr.mxu0 0.0
  %v612 = vand.u32 %v55, 4294901760
  %v613 = vsub.f32 %v55, %v612
  %v614 = vand.u32 %v613, 4294901760
  %615 = vmatpush1.msra.mxu0 %v614
  %616 = vmatprep.subr.mxu0 0.0
  %v617 = vand.u32 %v56, 4294901760
  %v618 = vsub.f32 %v56, %v617
  %v619 = vand.u32 %v618, 4294901760
  %620 = vmatpush1.msra.mxu0 %v619
  %621 = vmatprep.subr.mxu0 0.0
  %v622 = vand.u32 %v57, 4294901760
  %v623 = vsub.f32 %v57, %v622
  %v624 = vand.u32 %v623, 4294901760
  %625 = vmatpush1.msra.mxu0 %v624
  %626 = vmatprep.subr.mxu0 0.0
  %v627 = vand.u32 %v58, 4294901760
  %v628 = vsub.f32 %v58, %v627
  %v629 = vand.u32 %v628, 4294901760
  %630 = vmatpush1.msra.mxu0 %v629
  %631 = vmatprep.subr.mxu0 0.0
  %v632 = vand.u32 %v59, 4294901760
  %v633 = vsub.f32 %v59, %v632
  %v634 = vand.u32 %v633, 4294901760
  %635 = vmatpush1.msra.mxu0 %v634
  %636 = vmatprep.subr.mxu0 0.0
  %v637 = vand.u32 %v60, 4294901760
  %v638 = vsub.f32 %v60, %v637
  %v639 = vand.u32 %v638, 4294901760
  %640 = vmatpush1.msra.mxu0 %v639
  %641 = vmatprep.subr.mxu0 0.0
  %v642 = vand.u32 %v61, 4294901760
  %v643 = vsub.f32 %v61, %v642
  %v644 = vand.u32 %v643, 4294901760
  %645 = vmatpush1.msra.mxu0 %v644
  %646 = vmatprep.subr.mxu0 0.0
  %v647 = vand.u32 %v62, 4294901760
  %v648 = vsub.f32 %v62, %v647
  %v649 = vand.u32 %v648, 4294901760
  %650 = vmatpush1.msra.mxu0 %v649
  %651 = vmatprep.subr.mxu0 0.0
  %v652 = vand.u32 %v63, 4294901760
  %v653 = vsub.f32 %v63, %v652
  %v654 = vand.u32 %v653, 4294901760
  %655 = vmatpush1.msra.mxu0 %v654
  %656 = vmatprep.subr.mxu0 0.0
  %v657 = vand.u32 %v64, 4294901760
  %v658 = vsub.f32 %v64, %v657
  %v659 = vand.u32 %v658, 4294901760
  %660 = vmatpush1.msra.mxu0 %v659
  %661 = vmatprep.subr.mxu0 0.0
  %v662 = vand.u32 %v65, 4294901760
  %v663 = vsub.f32 %v65, %v662
  %v664 = vand.u32 %v663, 4294901760
  %665 = vmatpush1.msra.mxu0 %v664
  %666 = vmatprep.subr.mxu0 0.0
  %v667 = vand.u32 %v66, 4294901760
  %v668 = vsub.f32 %v66, %v667
  %v669 = vand.u32 %v668, 4294901760
  %670 = vmatpush1.msra.mxu0 %v669
  %671 = vmatprep.subr.mxu0 0.0
  %v672 = vand.u32 %v67, 4294901760
  %v673 = vsub.f32 %v67, %v672
  %v674 = vand.u32 %v673, 4294901760
  %675 = vmatpush1.msra.mxu0 %v674
  %676 = vmatprep.subr.mxu0 0.0
  %677 = vmatpush1.msra.mxu0 0.0
  %678 = vmatprep.subr.mxu0 0.0
  %679 = vmatpush1.msra.mxu0 0.0
  %680 = vmatprep.subr.mxu0 0.0
  %681 = vmatpush1.msra.mxu0 0.0
  %682 = vmatprep.subr.mxu0 0.0
  %683 = vmatpush1.msra.mxu0 0.0
  %684 = vmatprep.subr.mxu0 0.0
  %685 = vmatpush1.msra.mxu0 0.0
  %686 = vmatprep.subr.mxu0 0.0
  %687 = vmatpush1.msra.mxu0 0.0
  %688 = vmatprep.subr.mxu0 0.0
  %689 = vmatpush1.msra.mxu0 0.0
  %690 = vmatprep.subr.mxu0 0.0
  %691 = vmatpush1.msra.mxu0 0.0
  %692 = vmatprep.subr.mxu0 0.0
  %693 = vmatpush1.msra.mxu0 0.0
  %694 = vmatprep.subr.mxu0 0.0
  %695 = vmatpush1.msra.mxu0 0.0
  %696 = vmatprep.subr.mxu0 0.0
  %697 = vmatpush1.msra.mxu0 0.0
  %698 = vmatprep.subr.mxu0 0.0
  %699 = vmatpush1.msra.mxu0 0.0
  %700 = vmatprep.subr.mxu0 0.0
  %701 = vmatpush1.msra.mxu0 0.0
  %702 = vmatprep.subr.mxu0 0.0
  %703 = vmatpush1.msra.mxu0 0.0
  %704 = vmatprep.subr.mxu0 0.0
  %705 = vmatpush1.msra.mxu0 0.0
  %706 = vmatprep.subr.mxu0 0.0
  %707 = vmatpush1.msra.mxu0 0.0
  %708 = vmatprep.mubr.f32.mxu0 0.0
  %v709 = vand.u32 %v48, 4294901760
  %710 = vmatmul.mubr.f32.gmra.mrb[0].mxu0 %v709
  %v711 = vpop.f32.mrb[0].mxu0
  %v712 = vadd.f32 %v569, %v711
  %v713 = vpop.f32.mrb[0].mxu0
  %714 = vmatprep.mubr.f32.mxu0 0.0
  %v715 = vand.u32 %v49, 4294901760
  %716 = vmatmul.mubr.f32.gmra.mrb[0].mxu0 %v715
  %v717 = vpop.f32.mrb[0].mxu0
  %v718 = vadd.f32 %v577, %v717
  %v719 = vpop.f32.mrb[0].mxu0
  %720 = vmatprep.mubr.f32.mxu0 0.0
  %v721 = vand.u32 %v50, 4294901760
  %722 = vmatmul.mubr.f32.gmra.mrb[0].mxu0 %v721
  %v723 = vpop.f32.mrb[0].mxu0
  %v724 = vadd.f32 %v585, %v723
  %v725 = vpop.f32.mrb[0].mxu0
  %726 = vmatprep.mubr.f32.mxu0 0.0
  %v727 = vand.u32 %v51, 4294901760
  %728 = vmatmul.mubr.f32.gmra.mrb[0].mxu0 %v727
  %v729 = vpop.f32.mrb[0].mxu0
  %v730 = vadd.f32 %v593, %v729
  %v731 = vpop.f32.mrb[0].mxu0
  %732 = vdwg.mxu0
  %733 = vmatprep.subr.mxu0 0.0
  %v734 = vand.u32 %v52, 4294901760
  %735 = vmatpush1.msra.mxu0 %v734
  %736 = vmatprep.subr.mxu0 0.0
  %v737 = vand.u32 %v53, 4294901760
  %738 = vmatpush1.msra.mxu0 %v737
  %739 = vmatprep.subr.mxu0 0.0
  %v740 = vand.u32 %v54, 4294901760
  %741 = vmatpush1.msra.mxu0 %v740
  %742 = vmatprep.subr.mxu0 0.0
  %v743 = vand.u32 %v55, 4294901760
  %744 = vmatpush1.msra.mxu0 %v743
  %745 = vmatprep.subr.mxu0 0.0
  %v746 = vand.u32 %v56, 4294901760
  %747 = vmatpush1.msra.mxu0 %v746
  %748 = vmatprep.subr.mxu0 0.0
  %v749 = vand.u32 %v57, 4294901760
  %750 = vmatpush1.msra.mxu0 %v749
  %751 = vmatprep.subr.mxu0 0.0
  %v752 = vand.u32 %v58, 4294901760
  %753 = vmatpush1.msra.mxu0 %v752
  %754 = vmatprep.subr.mxu0 0.0
  %v755 = vand.u32 %v59, 4294901760
  %756 = vmatpush1.msra.mxu0 %v755
  %757 = vmatprep.subr.mxu0 0.0
  %v758 = vand.u32 %v60, 4294901760
  %759 = vmatpush1.msra.mxu0 %v758
  %760 = vmatprep.subr.mxu0 0.0
  %v761 = vand.u32 %v61, 4294901760
  %762 = vmatpush1.msra.mxu0 %v761
  %763 = vmatprep.subr.mxu0 0.0
  %v764 = vand.u32 %v62, 4294901760
  %765 = vmatpush1.msra.mxu0 %v764
  %766 = vmatprep.subr.mxu0 0.0
  %v767 = vand.u32 %v63, 4294901760
  %768 = vmatpush1.msra.mxu0 %v767
  %769 = vmatprep.subr.mxu0 0.0
  %v770 = vand.u32 %v64, 4294901760
  %771 = vmatpush1.msra.mxu0 %v770
  %772 = vmatprep.subr.mxu0 0.0
  %v773 = vand.u32 %v65, 4294901760
  %774 = vmatpush1.msra.mxu0 %v773
  %775 = vmatprep.subr.mxu0 0.0
  %v776 = vand.u32 %v66, 4294901760
  %777 = vmatpush1.msra.mxu0 %v776
  %778 = vmatprep.subr.mxu0 0.0
  %v779 = vand.u32 %v67, 4294901760
  %780 = vmatpush1.msra.mxu0 %v779
  %781 = vmatprep.subr.mxu0 0.0
  %782 = vmatpush1.msra.mxu0 0.0
  %783 = vmatprep.subr.mxu0 0.0
  %784 = vmatpush1.msra.mxu0 0.0
  %785 = vmatprep.subr.mxu0 0.0
  %786 = vmatpush1.msra.mxu0 0.0
  %787 = vmatprep.subr.mxu0 0.0
  %788 = vmatpush1.msra.mxu0 0.0
  %789 = vmatprep.subr.mxu0 0.0
  %790 = vmatpush1.msra.mxu0 0.0
  %791 = vmatprep.subr.mxu0 0.0
  %792 = vmatpush1.msra.mxu0 0.0
  %793 = vmatprep.subr.mxu0 0.0
  %794 = vmatpush1.msra.mxu0 0.0
  %795 = vmatprep.subr.mxu0 0.0
  %796 = vmatpush1.msra.mxu0 0.0
  %797 = vmatprep.subr.mxu0 0.0
  %798 = vmatpush1.msra.mxu0 0.0
  %799 = vmatprep.subr.mxu0 0.0
  %800 = vmatpush1.msra.mxu0 0.0
  %801 = vmatprep.subr.mxu0 0.0
  %802 = vmatpush1.msra.mxu0 0.0
  %803 = vmatprep.subr.mxu0 0.0
  %804 = vmatpush1.msra.mxu0 0.0
  %805 = vmatprep.subr.mxu0 0.0
  %806 = vmatpush1.msra.mxu0 0.0
  %807 = vmatprep.subr.mxu0 0.0
  %808 = vmatpush1.msra.mxu0 0.0
  %809 = vmatprep.subr.mxu0 0.0
  %810 = vmatpush1.msra.mxu0 0.0
  %811 = vmatprep.subr.mxu0 0.0
  %812 = vmatpush1.msra.mxu0 0.0
  %813 = vmatprep.mubr.f32.mxu0 0.0
  %v814 = vand.u32 %v48, 4294901760
  %815 = vmatmul.mubr.f32.gmra.mrb[0].mxu0 %v814
  %v816 = vpop.f32.mrb[0].mxu0
  %v817 = vadd.f32 %v712, %v816
  %v818 = vpop.f32.mrb[0].mxu0
  %819 = vmatprep.mubr.f32.mxu0 0.0
  %v820 = vand.u32 %v49, 4294901760
  %821 = vmatmul.mubr.f32.gmra.mrb[0].mxu0 %v820
  %v822 = vpop.f32.mrb[0].mxu0
  %v823 = vadd.f32 %v718, %v822
  %v824 = vpop.f32.mrb[0].mxu0
  %825 = vmatprep.mubr.f32.mxu0 0.0
  %v826 = vand.u32 %v50, 4294901760
  %827 = vmatmul.mubr.f32.gmra.mrb[0].mxu0 %v826
  %v828 = vpop.f32.mrb[0].mxu0
  %v829 = vadd.f32 %v724, %v828
  %v830 = vpop.f32.mrb[0].mxu0
  %831 = vmatprep.mubr.f32.mxu0 0.0
  %v832 = vand.u32 %v51, 4294901760
  %833 = vmatmul.mubr.f32.gmra.mrb[0].mxu0 %v832
  %v834 = vpop.f32.mrb[0].mxu0
  %v835 = vadd.f32 %v730, %v834
  %v836 = vpop.f32.mrb[0].mxu0
  %837 = vdwg.mxu0
  %v838 = vmul.f32 %v817, %v817
  %v839 = vmul.f32 %v823, %v823
  %v840 = vmul.f32 %v829, %v829
  %v841 = vmul.f32 %v835, %v835
  %846 = vrot.lane.b32.xlu0 %v838, 64
  %v847 = vpop.permute.xlu0 %846
  %848 = vrot.lane.b32.xlu0 %v839, 64
  %v849 = vpop.permute.xlu0 %848
  %850 = vrot.lane.b32.xlu0 %v840, 64
  %v851 = vpop.permute.xlu0 %850
  %852 = vrot.lane.b32.xlu0 %v841, 64
  %v853 = vpop.permute.xlu0 %852
  %v858 = vsub.f32 %v817, %v847
  %v859 = vsub.f32 %v823, %v849
  %v860 = vsub.f32 %v829, %v851
  %v861 = vsub.f32 %v835, %v853
  %v862 = vmax.f32 %v858, 0.0
  %v863 = vmax.f32 %v859, 0.0
  %v864 = vmax.f32 %v860, 0.0
  %v865 = vmax.f32 %v861, 0.0
  %v866 = vsub.f32 %v23, %v817
  %v867 = vsub.f32 %v24, %v823
  %v868 = vsub.f32 %v25, %v829
  %v869 = vsub.f32 %v26, %v835
  %v870 = vadd.f32 %v862, 1e-06
  %v871 = vadd.f32 %v863, 1e-06
  %v872 = vadd.f32 %v864, 1e-06
  %v873 = vadd.f32 %v865, 1e-06
  %v874 = vrsqrt.pop %v870
  %v875 = vrsqrt.pop %v871
  %v876 = vrsqrt.pop %v872
  %v877 = vrsqrt.pop %v873
  %882 = vrot.lane.b32.xlu0 %v874, 64
  %v883 = vpop.permute.xlu0 %882
  %884 = vrot.lane.b32.xlu0 %v875, 64
  %v885 = vpop.permute.xlu0 %884
  %886 = vrot.lane.b32.xlu0 %v876, 64
  %v887 = vpop.permute.xlu0 %886
  %888 = vrot.lane.b32.xlu0 %v877, 64
  %v889 = vpop.permute.xlu0 %888
  %v894 = vmul.f32 %v866, %v883
  %v895 = vmul.f32 %v867, %v885
  %v896 = vmul.f32 %v868, %v887
  %v897 = vmul.f32 %v869, %v889
  %v898 = vld [vmem:[%s2] sm:$0xff]
  %v899 = vld [vmem:[%s2 + $0x8] sm:$0xff]
  %v900 = vld [vmem:[%s2 + $0x10] sm:$0xff]
  %v901 = vld [vmem:[%s2 + $0x18] sm:$0xff]
  %v902 = vld [vmem:[%s2 + $0x20] sm:$0xff]
  %v903 = vld [vmem:[%s2 + $0x28] sm:$0xff]
  %v904 = vld [vmem:[%s2 + $0x30] sm:$0xff]
  %v905 = vld [vmem:[%s2 + $0x38] sm:$0xff]
  %v906 = vld [vmem:[%s3] sm:$0x1]
  %v908 = vlaneseq
  %v909 = vshrl.u32 %v908, 7
  %v910 = vsub.s32 0, %v909
  %v911 = vrot.slane %v906, %v910
  %v914 = vsel %vm47, %v894, 0
  %v917 = vsel %vm47, %v895, 0
  %v920 = vsel %vm47, %v896, 0
  %v923 = vsel %vm47, %v897, 0
  %925 = vmatprep.subr.mxu0 0.0
  %926 = vmatpush1.msra.mxu0 %v898
  %927 = vmatprep.subr.mxu0 0.0
  %928 = vmatpush1.msra.mxu0 %v899
  %929 = vmatprep.subr.mxu0 0.0
  %930 = vmatpush1.msra.mxu0 %v900
  %931 = vmatprep.subr.mxu0 0.0
  %932 = vmatpush1.msra.mxu0 %v901
  %933 = vmatprep.subr.mxu0 0.0
  %934 = vmatpush1.msra.mxu0 %v902
  %935 = vmatprep.subr.mxu0 0.0
  %936 = vmatpush1.msra.mxu0 %v903
  %937 = vmatprep.subr.mxu0 0.0
  %938 = vmatpush1.msra.mxu0 %v904
  %939 = vmatprep.subr.mxu0 0.0
  %940 = vmatpush1.msra.mxu0 %v905
  %941 = vmatprep.subr.mxu0 0.0
  %942 = vmatpush1.msra.mxu0 0.0
  %943 = vmatprep.subr.mxu0 0.0
  %944 = vmatpush1.msra.mxu0 0.0
  %945 = vmatprep.subr.mxu0 0.0
  %946 = vmatpush1.msra.mxu0 0.0
  %947 = vmatprep.subr.mxu0 0.0
  %948 = vmatpush1.msra.mxu0 0.0
  %949 = vmatprep.subr.mxu0 0.0
  %950 = vmatpush1.msra.mxu0 0.0
  %951 = vmatprep.subr.mxu0 0.0
  %952 = vmatpush1.msra.mxu0 0.0
  %953 = vmatprep.subr.mxu0 0.0
  %954 = vmatpush1.msra.mxu0 0.0
  %955 = vmatprep.subr.mxu0 0.0
  %956 = vmatpush1.msra.mxu0 0.0
  %957 = vmatprep.subr.mxu0 0.0
  %958 = vmatpush1.msra.mxu0 0.0
  %959 = vmatprep.subr.mxu0 0.0
  %960 = vmatpush1.msra.mxu0 0.0
  %961 = vmatprep.subr.mxu0 0.0
  %962 = vmatpush1.msra.mxu0 0.0
  %963 = vmatprep.subr.mxu0 0.0
  %964 = vmatpush1.msra.mxu0 0.0
  %965 = vmatprep.subr.mxu0 0.0
  %966 = vmatpush1.msra.mxu0 0.0
  %967 = vmatprep.subr.mxu0 0.0
  %968 = vmatpush1.msra.mxu0 0.0
  %969 = vmatprep.subr.mxu0 0.0
  %970 = vmatpush1.msra.mxu0 0.0
  %971 = vmatprep.subr.mxu0 0.0
  %972 = vmatpush1.msra.mxu0 0.0
  %973 = vmatprep.subr.mxu0 0.0
  %974 = vmatpush1.msra.mxu0 0.0
  %975 = vmatprep.subr.mxu0 0.0
  %976 = vmatpush1.msra.mxu0 0.0
  %977 = vmatprep.subr.mxu0 0.0
  %978 = vmatpush1.msra.mxu0 0.0
  %979 = vmatprep.subr.mxu0 0.0
  %980 = vmatpush1.msra.mxu0 0.0
  %981 = vmatprep.subr.mxu0 0.0
  %982 = vmatpush1.msra.mxu0 0.0
  %983 = vmatprep.subr.mxu0 0.0
  %984 = vmatpush1.msra.mxu0 0.0
  %985 = vmatprep.subr.mxu0 0.0
  %986 = vmatpush1.msra.mxu0 0.0
  %987 = vmatprep.subr.mxu0 0.0
  %988 = vmatpush1.msra.mxu0 0.0
  %989 = vmatprep.mubr.f32.mxu0 0.0
  %990 = vmatmul.mubr.f32.gmra.mrb[0].mxu0 %v914
  %v991 = vpop.f32.mrb[0].mxu0
  %v992 = vadd.f32 %v911, %v991
  %v993 = vpop.f32.mrb[0].mxu0
  %994 = vmatprep.mubr.f32.mxu0 0.0
  %995 = vmatmul.mubr.f32.gmra.mrb[0].mxu0 %v917
  %v996 = vpop.f32.mrb[0].mxu0
  %v997 = vadd.f32 %v911, %v996
  %v998 = vpop.f32.mrb[0].mxu0
  %999 = vmatprep.mubr.f32.mxu0 0.0
  %1000 = vmatmul.mubr.f32.gmra.mrb[0].mxu0 %v920
  %v1001 = vpop.f32.mrb[0].mxu0
  %v1002 = vadd.f32 %v911, %v1001
  %v1003 = vpop.f32.mrb[0].mxu0
  %1004 = vmatprep.mubr.f32.mxu0 0.0
  %1005 = vmatmul.mubr.f32.gmra.mrb[0].mxu0 %v923
  %v1006 = vpop.f32.mrb[0].mxu0
  %v1007 = vadd.f32 %v911, %v1006
  %v1008 = vpop.f32.mrb[0].mxu0
  %1009 = vdwg.mxu0
  %v1010 = vld [vmem:[%s4] sm:$0xff]
  %v1011 = vld [vmem:[%s4 + $0x8] sm:$0xff]
  %v1012 = vld [vmem:[%s5] sm:$0xff]
  %v1013 = vld [vmem:[%s5 + $0x8] sm:$0xff]
  %1015 = vset.pattern.permute.xlu0 0
  %1016 = vperm.xlu0 %1015, %v1012
  %v1017 = vpop.permute.xlu0 %1016
  %1020 = vset.pattern.permute.xlu0 0
  %1021 = vperm.xlu0 %1020, %v1013
  %v1022 = vpop.permute.xlu0 %1021
  %vm1024 = vcmask 130048
  %v1026 = vsel %vm1024, %v1010, 0
  %v1029 = vsel %vm1024, %v1011, 0
  %1031 = vmatprep.subr.mxu0 0.0
  %1032 = vmatpush1.msra.mxu0 %v992
  %1033 = vmatprep.subr.mxu0 0.0
  %1034 = vmatpush1.msra.mxu0 %v997
  %1035 = vmatprep.subr.mxu0 0.0
  %1036 = vmatpush1.msra.mxu0 0.0
  %1037 = vmatprep.subr.mxu0 0.0
  %1038 = vmatpush1.msra.mxu0 0.0
  %1039 = vmatprep.subr.mxu0 0.0
  %1040 = vmatpush1.msra.mxu0 0.0
  %1041 = vmatprep.subr.mxu0 0.0
  %1042 = vmatpush1.msra.mxu0 0.0
  %1043 = vmatprep.subr.mxu0 0.0
  %1044 = vmatpush1.msra.mxu0 0.0
  %1045 = vmatprep.subr.mxu0 0.0
  %1046 = vmatpush1.msra.mxu0 0.0
  %1047 = vmatprep.subr.mxu0 0.0
  %1048 = vmatpush1.msra.mxu0 0.0
  %1049 = vmatprep.subr.mxu0 0.0
  %1050 = vmatpush1.msra.mxu0 0.0
  %1051 = vmatprep.subr.mxu0 0.0
  %1052 = vmatpush1.msra.mxu0 0.0
  %1053 = vmatprep.subr.mxu0 0.0
  %1054 = vmatpush1.msra.mxu0 0.0
  %1055 = vmatprep.subr.mxu0 0.0
  %1056 = vmatpush1.msra.mxu0 0.0
  %1057 = vmatprep.subr.mxu0 0.0
  %1058 = vmatpush1.msra.mxu0 0.0
  %1059 = vmatprep.subr.mxu0 0.0
  %1060 = vmatpush1.msra.mxu0 0.0
  %1061 = vmatprep.subr.mxu0 0.0
  %1062 = vmatpush1.msra.mxu0 0.0
  %1063 = vmatprep.subr.mxu0 0.0
  %1064 = vmatpush1.msra.mxu0 0.0
  %1065 = vmatprep.subr.mxu0 0.0
  %1066 = vmatpush1.msra.mxu0 0.0
  %1067 = vmatprep.subr.mxu0 0.0
  %1068 = vmatpush1.msra.mxu0 0.0
  %1069 = vmatprep.subr.mxu0 0.0
  %1070 = vmatpush1.msra.mxu0 0.0
  %1071 = vmatprep.subr.mxu0 0.0
  %1072 = vmatpush1.msra.mxu0 0.0
  %1073 = vmatprep.subr.mxu0 0.0
  %1074 = vmatpush1.msra.mxu0 0.0
  %1075 = vmatprep.subr.mxu0 0.0
  %1076 = vmatpush1.msra.mxu0 0.0
  %1077 = vmatprep.subr.mxu0 0.0
  %1078 = vmatpush1.msra.mxu0 0.0
  %1079 = vmatprep.subr.mxu0 0.0
  %1080 = vmatpush1.msra.mxu0 0.0
  %1081 = vmatprep.subr.mxu0 0.0
  %1082 = vmatpush1.msra.mxu0 0.0
  %1083 = vmatprep.subr.mxu0 0.0
  %1084 = vmatpush1.msra.mxu0 0.0
  %1085 = vmatprep.subr.mxu0 0.0
  %1086 = vmatpush1.msra.mxu0 0.0
  %1087 = vmatprep.subr.mxu0 0.0
  %1088 = vmatpush1.msra.mxu0 0.0
  %1089 = vmatprep.subr.mxu0 0.0
  %1090 = vmatpush1.msra.mxu0 0.0
  %1091 = vmatprep.subr.mxu0 0.0
  %1092 = vmatpush1.msra.mxu0 0.0
  %1093 = vmatprep.subr.mxu0 0.0
  %1094 = vmatpush1.msra.mxu0 0.0
  %1095 = vmatprep.mubr.f32.mxu0 0.0
  %1096 = vmatmul.mubr.f32.gmra.mrb[0].mxu0 %v1026
  %v1097 = vpop.f32.mrb[0].mxu0
  %v1098 = vadd.f32 %v1017, %v1097
  %v1099 = vpop.f32.mrb[0].mxu0
  %1100 = vmatprep.mubr.f32.mxu0 0.0
  %1101 = vmatmul.mubr.f32.gmra.mrb[0].mxu0 %v1029
  %v1102 = vpop.f32.mrb[0].mxu0
  %v1103 = vadd.f32 %v1022, %v1102
  %v1104 = vpop.f32.mrb[0].mxu0
  %1105 = vdwg.mxu0
  %vm1106 = vcmask 64512
  %1107 = vst.msk [vmem:[%s6] sm:$0xff] %vm1106, %v1098
  %1108 = vst.msk [vmem:[%s6 + $0x8] sm:$0xff] %vm1106, %v1103
  %1109 = vmatprep.subr.mxu0 0.0
  %1110 = vmatpush1.msra.mxu0 %v1002
  %1111 = vmatprep.subr.mxu0 0.0
  %1112 = vmatpush1.msra.mxu0 %v1007
  %1113 = vmatprep.subr.mxu0 0.0
  %1114 = vmatpush1.msra.mxu0 0.0
  %1115 = vmatprep.subr.mxu0 0.0
  %1116 = vmatpush1.msra.mxu0 0.0
  %1117 = vmatprep.subr.mxu0 0.0
  %1118 = vmatpush1.msra.mxu0 0.0
  %1119 = vmatprep.subr.mxu0 0.0
  %1120 = vmatpush1.msra.mxu0 0.0
  %1121 = vmatprep.subr.mxu0 0.0
  %1122 = vmatpush1.msra.mxu0 0.0
  %1123 = vmatprep.subr.mxu0 0.0
  %1124 = vmatpush1.msra.mxu0 0.0
  %1125 = vmatprep.subr.mxu0 0.0
  %1126 = vmatpush1.msra.mxu0 0.0
  %1127 = vmatprep.subr.mxu0 0.0
  %1128 = vmatpush1.msra.mxu0 0.0
  %1129 = vmatprep.subr.mxu0 0.0
  %1130 = vmatpush1.msra.mxu0 0.0
  %1131 = vmatprep.subr.mxu0 0.0
  %1132 = vmatpush1.msra.mxu0 0.0
  %1133 = vmatprep.subr.mxu0 0.0
  %1134 = vmatpush1.msra.mxu0 0.0
  %1135 = vmatprep.subr.mxu0 0.0
  %1136 = vmatpush1.msra.mxu0 0.0
  %1137 = vmatprep.subr.mxu0 0.0
  %1138 = vmatpush1.msra.mxu0 0.0
  %1139 = vmatprep.subr.mxu0 0.0
  %1140 = vmatpush1.msra.mxu0 0.0
  %1141 = vmatprep.subr.mxu0 0.0
  %1142 = vmatpush1.msra.mxu0 0.0
  %1143 = vmatprep.subr.mxu0 0.0
  %1144 = vmatpush1.msra.mxu0 0.0
  %1145 = vmatprep.subr.mxu0 0.0
  %1146 = vmatpush1.msra.mxu0 0.0
  %1147 = vmatprep.subr.mxu0 0.0
  %1148 = vmatpush1.msra.mxu0 0.0
  %1149 = vmatprep.subr.mxu0 0.0
  %1150 = vmatpush1.msra.mxu0 0.0
  %1151 = vmatprep.subr.mxu0 0.0
  %1152 = vmatpush1.msra.mxu0 0.0
  %1153 = vmatprep.subr.mxu0 0.0
  %1154 = vmatpush1.msra.mxu0 0.0
  %1155 = vmatprep.subr.mxu0 0.0
  %1156 = vmatpush1.msra.mxu0 0.0
  %1157 = vmatprep.subr.mxu0 0.0
  %1158 = vmatpush1.msra.mxu0 0.0
  %1159 = vmatprep.subr.mxu0 0.0
  %1160 = vmatpush1.msra.mxu0 0.0
  %1161 = vmatprep.subr.mxu0 0.0
  %1162 = vmatpush1.msra.mxu0 0.0
  %1163 = vmatprep.subr.mxu0 0.0
  %1164 = vmatpush1.msra.mxu0 0.0
  %1165 = vmatprep.subr.mxu0 0.0
  %1166 = vmatpush1.msra.mxu0 0.0
  %1167 = vmatprep.subr.mxu0 0.0
  %1168 = vmatpush1.msra.mxu0 0.0
  %1169 = vmatprep.subr.mxu0 0.0
  %1170 = vmatpush1.msra.mxu0 0.0
  %1171 = vmatprep.subr.mxu0 0.0
  %1172 = vmatpush1.msra.mxu0 0.0
  %1173 = vmatprep.mubr.f32.mxu0 0.0
  %1174 = vmatmul.mubr.f32.gmra.mrb[0].mxu0 %v1026
  %v1175 = vpop.f32.mrb[0].mxu0
  %v1176 = vadd.f32 %v1017, %v1175
  %v1177 = vpop.f32.mrb[0].mxu0
  %1178 = vmatprep.mubr.f32.mxu0 0.0
  %1179 = vmatmul.mubr.f32.gmra.mrb[0].mxu0 %v1029
  %v1180 = vpop.f32.mrb[0].mxu0
  %v1181 = vadd.f32 %v1022, %v1180
  %v1182 = vpop.f32.mrb[0].mxu0
  %1183 = vdwg.mxu0
  %s1184 = scalar_lea.vmem %s6, 16
  %1185 = vst.msk [vmem:[%s1184] sm:$0xff] %vm1106, %v1176
  %1186 = vst.msk [vmem:[%s1184 + $0x8] sm:$0xff] %vm1106, %v1181
  // Predicated region
  $region26: #{apply.1} parent=0 // pred_check
    _
  $region27: #{apply.1} parent=0 // pred_check_branch
    %1188 = sbr.rel (0) target = $region29
  $region28: #{apply.1} parent=0 // pred_region
    _
  $region29: #{apply.1} parent=0 // pred_fallthru
    _
  // Predicated region
  $region30: #{apply.1} parent=0 // pred_check
    _
  $region31: #{apply.1} parent=0 // pred_check_branch
    %1190 = sbr.rel (0) target = $region33
  $region32: #{apply.1} parent=0 // pred_region
    _
  $region33: #{apply.1} parent=0 // pred_fallthru
    _

</llo_original>
